<compile_context>
chip_gen: v5e
topology: v5e:2x2
jax: 0.10.0
libtpu: 0.0.40
codegen_flags: <defaults>
</compile_context>

<pallas_src>
import functools

import jax
import jax.numpy as jnp
from jax import lax
from jax.experimental import pallas as pl
from jax.experimental.pallas import tpu as pltpu

_SUB_ROWS = 256            # in-kernel sub-block size (packed output rows)
_MAX_PALLAS_VOCAB = 2048   # beyond this, one-hot matmul stops being the right design


def _round_up(x, m):
    return ((x + m - 1) // m) * m


def _embed_kernel(idx_ref, w_ref, o_ref, *, groups, vp, sub_rows, n_sub):
    """One grid step: packed-row embedding lookup as one-hot @ block-diag table.

    idx_ref: (TNg, G)    int32  raw class ids (token g of packed row r)
    w_ref:   (G*Vp, G*D) f32    block-diagonal embedding table (VMEM resident)
    o_ref:   (TNg, G*D)  f32    lane-dense output tile
    """
    gvp = w_ref.shape[0]

    def sub_block(r0):
        ids = idx_ref[pl.ds(r0, sub_rows), :]
        lane = lax.broadcasted_iota(jnp.int32, (sub_rows, gvp), 1)
        # Group g's id (offset by g*Vp) can only match lanes in
        # [g*Vp, (g+1)*Vp), so OR-ing the per-group compares yields exactly one
        # hot lane per token of the packed row.
        onehot = lane == ids[:, 0:1]
        for g in range(1, groups):
            onehot = jnp.logical_or(onehot, lane == (ids[:, g:g + 1] + g * vp))
        # Exactly one nonzero term per output element -> the f32 MXU matmul
        # reproduces the table values bit-exactly.
        o_ref[pl.ds(r0, sub_rows), :] = jnp.dot(
            onehot.astype(jnp.float32), w_ref[...],
            preferred_element_type=jnp.float32)

    if n_sub == 1:
        sub_block(0)
    else:
        # Sub-blocking bounds the one-hot temporary and overlaps VPU (one-hot
        # build) with MXU (matmul) across sub-blocks.
        def body(s, carry):
            sub_block(pl.multiple_of(s * sub_rows, sub_rows))
            return carry

        lax.fori_loop(0, n_sub, body, 0, unroll=True)


@functools.partial(
    jax.jit, static_argnames=("num_classes", "d_model", "rows_per_tile"))
def discrete_encoder(x, emb_weight, *, num_classes, d_model, rows_per_tile=4096):
    """x: (B, S, 1) integer ids; emb_weight: (num_classes + 1, d_model) f32."""
    B, S, _ = x.shape
    D = d_model
    V = num_classes + 1
    N = B * S

    idx_flat = x.reshape(N).astype(jnp.int32)
    # Safety clamp: PyTorch's nn.Embedding raises on out-of-range ids; the
    # one-hot kernel would silently alias them into a neighbouring group's
    # block, so clamp into the valid range instead.
    idx_flat = jnp.clip(idx_flat, 0, num_classes)

    if V > _MAX_PALLAS_VOCAB:
        # TODO(synk): dedicated DMA-gather Pallas kernel for large vocabularies.
        return emb_weight.astype(jnp.float32)[idx_flat].reshape(B, S, 1, D)

    # Lane packing: G consecutive tokens share one output row of width P = G*D
    # (a multiple of 128) so HBM stores are full-lane, not masked partials.
    G = (128 // D) if (D < 128 and 128 % D == 0) else 1
    P = G * D
    Vp = _round_up(V, max(128 // G, 1))   # per-group padded vocab; G*Vp % 128 == 0
    GVp = G * Vp

    # Block-diagonal table: group g maps class c to row g*Vp + c and columns
    # [g*D, (g+1)*D).  Built at trace time; cache outside jit if emb_weight is
    # reused across many calls.
    E = emb_weight.astype(jnp.float32)
    w_blk = jnp.zeros((GVp, P), jnp.float32)
    for g in range(G):
        w_blk = lax.dynamic_update_slice(w_blk, E, (g * Vp, g * D))

    # Pack G tokens per row; pad the tail with the zero-embedding (padding) id.
    Ng = -(-N // G)
    idx = jnp.pad(idx_flat, (0, Ng * G - N), constant_values=num_classes)
    idx = idx.reshape(Ng, G)

    # Tile selection: big tiles to amortize per-step overhead, >=2 grid steps
    # when there is enough work (v7x megacore), sub-block size dividing TNg.
    if Ng <= _SUB_ROWS:
        TNg, sub_rows = Ng, Ng        # single full-array block (legal block shape)
    else:
        TNg = min(int(rows_per_tile), _round_up(-(-Ng // 2), _SUB_ROWS))
        TNg = max(_SUB_ROWS, (TNg // _SUB_ROWS) * _SUB_ROWS)
        sub_rows = _SUB_ROWS
    n_sub = TNg // sub_rows
    grid = (pl.cdiv(Ng, TNg),)        # partial last block is masked by Pallas

    # Honest VMEM budget: lane-padded int32 idx tiles and f32 output tiles
    # (double-buffered), single-buffered resident table, one-hot temporaries
    # (bool mask + f32), plus slack for compiler-internal scratch.
    vmem_limit = int(
        2 * TNg * 128 * 4            # idx blocks (last dim lane-padded to 128)
        + 2 * TNg * P * 4            # output blocks
        + 1 * GVp * P * 4            # resident table (single-buffered)
        + sub_rows * GVp * 16        # one-hot temporaries per sub-block
        + (4 << 20))
    vmem_limit = min(max(vmem_limit, 16 << 20), 60 << 20)

    kernel = functools.partial(
        _embed_kernel, groups=G, vp=Vp, sub_rows=sub_rows, n_sub=n_sub)

    out = pl.pallas_call(
        kernel,
        out_shape=jax.ShapeDtypeStruct((Ng, P), jnp.float32),
        grid_spec=pl.GridSpec(
            grid=grid,
            in_specs=[
                pl.BlockSpec((TNg, G), lambda i: (i, 0)),       # packed class ids
                pl.BlockSpec((GVp, P), lambda i: (0, 0),        # table: constant
                             pipeline_mode=pl.Buffered(1)),     # block, 1 buffer
            ],
            out_specs=pl.BlockSpec((TNg, P), lambda i: (i, 0)),
        ),
        compiler_params=pltpu.CompilerParams(
            dimension_semantics=("parallel",),
            vmem_limit_bytes=vmem_limit,
        ),
    )(idx, w_blk)

    # (Ng, G*D) row-major is bit-identical to (Ng*G, D).  The [:N] slice is an
    # identity (free) whenever G divides N; only ragged token counts pay a copy.
    out = out.reshape(Ng * G, D)
    if Ng * G != N:
        out = out[:N]
    return out.reshape(B, S, 1, D)


def _reference(x, emb_weight):
    # Pure-JAX mirror of the PyTorch forward.
    idx = x.astype(jnp.int32)[..., 0]        # (B, S)
    return emb_weight[idx][:, :, None, :]    # (B, S, 1, D)


if __name__ == "__main__":
    d_model = 32
    num_classes = 16          # index num_classes == "missing" -> zero embedding

    key = jax.random.PRNGKey(0)
    kx1, kx2, kx3, kw = jax.random.split(key, 4)

    # Embedding table with the padding row zeroed, as in the PyTorch __init__.
    emb_weight = jax.random.normal(kw, (num_classes + 1, d_model), jnp.float32)
    emb_weight = emb_weight.at[num_classes].set(0.0)

    def check(x):
        out = jax.block_until_ready(
            discrete_encoder(x, emb_weight, num_classes=num_classes,
                             d_model=d_model))
        ref = _reference(x, emb_weight)
        assert out.shape == ref.shape, (out.shape, ref.shape)
        assert jnp.allclose(out, ref, atol=1e-6, rtol=1e-6), float(
            jnp.max(jnp.abs(out - ref)))

    # Small case (B=2, S=8) with a couple of "missing" (padding) ids.
    x1 = jax.random.randint(kx1, (2, 8, 1), 0, num_classes, dtype=jnp.int32)
    x1 = x1.at[0, 2, 0].set(num_classes).at[1, 5, 0].set(num_classes)
    check(x1)

    # Token count not divisible by the lane-packing factor (exercises tail pad).
    x2 = jax.random.randint(kx2, (1, 5, 1), 0, num_classes, dtype=jnp.int32)
    check(x2)

    # Larger case exercising the multi-step grid and in-kernel sub-block loop.
    x3 = jax.random.randint(kx3, (8, 512, 1), 0, num_classes, dtype=jnp.int32)
    x3 = x3.at[3, 100, 0].set(num_classes)
    check(x3)

    print("KERNEL_OK")
</pallas_src>

<mosaic_0001>
module attributes {stable_mosaic.version = 11 : i64} {
  func.func @_embed_kernel(%arg0: i32, %arg1: memref<4x4xi32, #tpu.memory_space<vmem>>, %arg2: memref<128x128xf32, #tpu.memory_space<vmem>>, %arg3: memref<4x128xf32, #tpu.memory_space<vmem>>) attributes {dimension_semantics = [#tpu.dimension_semantics<parallel>], iteration_bounds = array<i64: 1>, scalar_prefetch = 0 : i64, scratch_operands = 0 : i64, tpu.core_type = #tpu.core_type<tc>, window_params = [{transform_indices = @transform_0, window_bounds = array<i64: 4, 4>}, {pipeline_mode = #tpu.pipeline_mode<synchronous>, transform_indices = @transform_1, window_bounds = array<i64: 128, 128>}, {transform_indices = @transform_2, window_bounds = array<i64: 4, 128>}]} {
    %c0 = arith.constant 0 : index
    %c0_0 = arith.constant 0 : index
    %0 = vector.load %arg1[%c0, %c0_0] : memref<4x4xi32, #tpu.memory_space<vmem>>, vector<4x4xi32>
    %1 = tpu.iota {dimensions = array<i32: 1>} : vector<4x128xi32>
    %2 = vector.extract_strided_slice %0 {offsets = [0, 0], sizes = [4, 1], strides = [1, 1]} : vector<4x4xi32> to vector<4x1xi32>
    %3 = vector.broadcast %2 : vector<4x1xi32> to vector<4x128xi32>
    %4 = arith.cmpi eq, %1, %3 : vector<4x128xi32>
    %5 = vector.extract_strided_slice %0 {offsets = [0, 1], sizes = [4, 1], strides = [1, 1]} : vector<4x4xi32> to vector<4x1xi32>
    %c32_i32 = arith.constant 32 : i32
    %6 = vector.broadcast %c32_i32 : i32 to vector<4x1xi32>
    %7 = arith.addi %5, %6 : vector<4x1xi32>
    %8 = vector.broadcast %7 : vector<4x1xi32> to vector<4x128xi32>
    %9 = arith.cmpi eq, %1, %8 : vector<4x128xi32>
    %10 = arith.ori %4, %9 : vector<4x128xi1>
    %11 = vector.extract_strided_slice %0 {offsets = [0, 2], sizes = [4, 1], strides = [1, 1]} : vector<4x4xi32> to vector<4x1xi32>
    %c64_i32 = arith.constant 64 : i32
    %12 = vector.broadcast %c64_i32 : i32 to vector<4x1xi32>
    %13 = arith.addi %11, %12 : vector<4x1xi32>
    %14 = vector.broadcast %13 : vector<4x1xi32> to vector<4x128xi32>
    %15 = arith.cmpi eq, %1, %14 : vector<4x128xi32>
    %16 = arith.ori %10, %15 : vector<4x128xi1>
    %17 = vector.extract_strided_slice %0 {offsets = [0, 3], sizes = [4, 1], strides = [1, 1]} : vector<4x4xi32> to vector<4x1xi32>
    %c96_i32 = arith.constant 96 : i32
    %18 = vector.broadcast %c96_i32 : i32 to vector<4x1xi32>
    %19 = arith.addi %17, %18 : vector<4x1xi32>
    %20 = vector.broadcast %19 : vector<4x1xi32> to vector<4x128xi32>
    %21 = arith.cmpi eq, %1, %20 : vector<4x128xi32>
    %22 = arith.ori %16, %21 : vector<4x128xi1>
    %23 = arith.extui %22 : vector<4x128xi1> to vector<4x128xi32>
    %24 = arith.sitofp %23 : vector<4x128xi32> to vector<4x128xf32>
    %c0_1 = arith.constant 0 : index
    %c0_2 = arith.constant 0 : index
    %25 = vector.load %arg2[%c0_1, %c0_2] : memref<128x128xf32, #tpu.memory_space<vmem>>, vector<128x128xf32>
    %cst = arith.constant dense<0.000000e+00> : vector<4x128xf32>
    %26 = tpu.matmul %24, %25, %cst {dimension_numbers = #tpu.dot_dimension_numbers<[1], [0], [0], [1], [0, 0, 1, 1], [], []>} : vector<4x128xf32>, vector<128x128xf32>, vector<4x128xf32> -> vector<4x128xf32>
    %c0_3 = arith.constant 0 : index
    %c0_4 = arith.constant 0 : index
    %27 = vector.load %arg3[%c0_3, %c0_4] : memref<4x128xf32, #tpu.memory_space<vmem>>, vector<4x128xf32>
    tpu.vector_store %arg3[%c0_3, %c0_4], %26 {strides = array<i32>} : memref<4x128xf32, #tpu.memory_space<vmem>>, vector<4x128xf32>,
    return
  }
  func.func @transform_0(%arg0: i32) -> (i32, i32) {
    %c0_i32 = arith.constant 0 : i32
    %c0_i32_0 = arith.constant 0 : i32
    return %arg0, %c0_i32 : i32, i32
  }
  func.func @transform_1(%arg0: i32) -> (i32, i32) {
    %c0_i32 = arith.constant 0 : i32
    %c0_i32_0 = arith.constant 0 : i32
    %c0_i32_1 = arith.constant 0 : i32
    return %c0_i32, %c0_i32_0 : i32, i32
  }
  func.func @transform_2(%arg0: i32) -> (i32, i32) {
    %c0_i32 = arith.constant 0 : i32
    %c0_i32_0 = arith.constant 0 : i32
    return %arg0, %c0_i32 : i32, i32
  }
}

</mosaic_0001>

<llo_original>
// kernel: discrete_encoder.1
$region0: #{discrete_encoder.1}
  #allocation0 [shape = 'u32[]', space=smem, size = 0x4, offset = 0x4, fixed_abs, tag = 'smem constant byte address 0x4 - core index']
  #allocation1 [shape = 'u32[72,128]{1,0:T(1,128)}', space=vmem, size = 0x9000, scoped, tag = 'internal scratch']
  %s0 = inlined_call_operand.vmem [shape: s32[4,4], index: 0, kind: input, shape index: {}]
  %s1 = inlined_call_operand.vmem [shape: f32[128,128], index: 1, kind: input, shape index: {}]
  %s2 = inlined_call_operand.vmem [shape: f32[4,128], index: 2, kind: output, shape index: {}]
  %s3 = sld [smem:[#allocation0]]
  $region18: #{discrete_encoder.1} parent=0
    _
  %s5 = ssub.s32 1, %s3
  %s6 = scalar_select 0, %s5, %s3
  // Predicated region
  $region2: #{discrete_encoder.1} parent=0 // pred_check
    _
  $region3: #{discrete_encoder.1} parent=0 // pred_check_branch
    %8 = sbr.rel (0) target = $region5
  $region4: #{discrete_encoder.1} parent=0 // pred_region
    _
  $region5: #{discrete_encoder.1} parent=0 // pred_fallthru
    _
  // Predicated region
  $region6: #{discrete_encoder.1} parent=0 // pred_check
    _
  $region7: #{discrete_encoder.1} parent=0 // pred_check_branch
    %10 = sbr.rel (0) target = $region9
  $region8: #{discrete_encoder.1} parent=0 // pred_region
    _
  $region9: #{discrete_encoder.1} parent=0 // pred_fallthru
    _
  %v11 = vld [vmem:[%s0] sm:$0xf]
  %v12 = vlaneseq
  %v13 = vand.u32 %v12, 127
  %14 = vset.pattern.permute.xlu0 0
  %15 = vperm.xlu0 %14, %v11
  %v16 = vpop.permute.xlu0 %15
  %vm17 = vcmp.eq.s32.totalorder %v13, %v16
  %v18 = vadd.s32 %v11, 32
  %19 = vset.pattern.permute.xlu0 1
  %20 = vperm.xlu0 %19, %v18
  %v21 = vpop.permute.xlu0 %20
  %vm22 = vcmp.eq.s32.totalorder %v13, %v21
  %vm23 = vmor %vm17, %vm22
  %v24 = vadd.s32 %v11, 64
  %25 = vset.pattern.permute.xlu0 2
  %26 = vperm.xlu0 %25, %v24
  %v27 = vpop.permute.xlu0 %26
  %vm28 = vcmp.eq.s32.totalorder %v13, %v27
  %vm29 = vmor %vm23, %vm28
  %v30 = vadd.s32 %v11, 96
  %31 = vset.pattern.permute.xlu0 3
  %32 = vperm.xlu0 %31, %v30
  %v33 = vpop.permute.xlu0 %32
  %vm34 = vcmp.eq.s32.totalorder %v13, %v33
  %vm35 = vmor %vm29, %vm34
  %v36 = vsel %vm35, 1, 0
  %v37 = vcvt.s32.f32 %v36
  %v38 = vld [vmem:[%s1] sm:$0xff]
  %v39 = vld [vmem:[%s1 + $0x8] sm:$0xff]
  %v40 = vld [vmem:[%s1 + $0x10] sm:$0xff]
  %v41 = vld [vmem:[%s1 + $0x18] sm:$0xff]
  %v42 = vld [vmem:[%s1 + $0x20] sm:$0xff]
  %v43 = vld [vmem:[%s1 + $0x28] sm:$0xff]
  %v44 = vld [vmem:[%s1 + $0x30] sm:$0xff]
  %v45 = vld [vmem:[%s1 + $0x38] sm:$0xff]
  %v46 = vld [vmem:[%s1 + $0x40] sm:$0xff]
  %v47 = vld [vmem:[%s1 + $0x48] sm:$0xff]
  %v48 = vld [vmem:[%s1 + $0x50] sm:$0xff]
  %v49 = vld [vmem:[%s1 + $0x58] sm:$0xff]
  %v50 = vld [vmem:[%s1 + $0x60] sm:$0xff]
  %v51 = vld [vmem:[%s1 + $0x68] sm:$0xff]
  %v52 = vld [vmem:[%s1 + $0x70] sm:$0xff]
  %v53 = vld [vmem:[%s1 + $0x78] sm:$0xff]
  %54 = vmatpush.msra.mxu0 %v53
  %55 = vmatpush.msra.mxu0 %v52
  %56 = vmatpush.msra.mxu0 %v51
  %57 = vmatpush.msra.mxu0 %v50
  %58 = vmatpush.msra.mxu0 %v49
  %59 = vmatpush.msra.mxu0 %v48
  %60 = vmatpush.msra.mxu0 %v47
  %61 = vmatpush.msra.mxu0 %v46
  %62 = vmatpush.msra.mxu0 %v45
  %63 = vmatpush.msra.mxu0 %v44
  %64 = vmatpush.msra.mxu0 %v43
  %65 = vmatpush.msra.mxu0 %v42
  %66 = vmatpush.msra.mxu0 %v41
  %67 = vmatpush.msra.mxu0 %v40
  %68 = vmatpush.msra.mxu0 %v39
  %69 = vmatpush.msra.mxu0 %v38
  %70 = vmatmul.f32.gmra.mxu0 %v37
  %v71 = vpop.f32.mrf.mxu0
  %v72 = vadd.f32 0.0, %v71
  %73 = vdwg.mxu0
  %74 = vst [vmem:[%s2] sm:$0xf] %v72
  // Predicated region
  $region10: #{discrete_encoder.1} parent=0 // pred_check
    _
  $region11: #{discrete_encoder.1} parent=0 // pred_check_branch
    %76 = sbr.rel (0) target = $region13
  $region12: #{discrete_encoder.1} parent=0 // pred_region
    _
  $region13: #{discrete_encoder.1} parent=0 // pred_fallthru
    _
  // Predicated region
  $region14: #{discrete_encoder.1} parent=0 // pred_check
    _
  $region15: #{discrete_encoder.1} parent=0 // pred_check_branch
    %78 = sbr.rel (0) target = $region17
  $region16: #{discrete_encoder.1} parent=0 // pred_region
    _
  $region17: #{discrete_encoder.1} parent=0 // pred_fallthru
    _

</llo_original>
